<compile_context>
chip_gen: v7x
topology: tpu7x:2x2x1
jax: 0.10.0
libtpu: 0.0.40
codegen_flags: <defaults>
</compile_context>

<pallas_src>
import jax
import jax.numpy as jnp
from jax.experimental import pallas as pl
from jax.experimental.pallas import tpu as pltpu


def _conv_merge_kernel(x_ref, w_ref, b_ref, o_ref):
    # x_ref: (tr, 2, Wo, 2C)   two consecutive image rows per output row
    # w_ref: (2, 2C, N)        BN-folded conv weights (di = 0 / 1)
    # b_ref: (1, N)            BN-folded bias (f32)
    # o_ref: (tr, Wo, N)
    tr, _, wo, k2 = x_ref.shape
    n = o_ref.shape[-1]

    xb = x_ref[...]                                   # (tr, 2, Wo, 2C)
    x_top = xb[:, 0, :, :].reshape(tr * wo, k2)       # (tr*Wo, 2C)
    x_bot = xb[:, 1, :, :].reshape(tr * wo, k2)
    w = w_ref[...]                                    # (2, 2C, N)

    acc = jnp.dot(x_top, w[0], preferred_element_type=jnp.float32)
    acc = acc + jnp.dot(x_bot, w[1], preferred_element_type=jnp.float32)
    acc = acc + b_ref[...]                            # (1, N) broadcast, f32
    o_ref[...] = acc.reshape(tr, wo, n).astype(o_ref.dtype)


def _pick_row_tile(m_rows, wo, k2, n, itemsize,
                   budget_bytes=12 << 20, max_mm_rows=4096):
    """Largest divisor of m_rows whose (double-buffered) blocks fit VMEM."""
    def block_bytes(tr):
        x_blk = tr * 2 * wo * k2 * itemsize
        o_blk = tr * wo * n * itemsize
        w_blk = 2 * k2 * n * itemsize
        b_blk = n * 4
        return 2 * (x_blk + o_blk) + 2 * (w_blk + b_blk)

    divs = sorted({d for d in range(1, m_rows + 1) if m_rows % d == 0},
                  reverse=True)
    for tr in divs:
        if tr * wo <= max_mm_rows and block_bytes(tr) <= budget_bytes:
            return tr
    return 1


def conv_merging_forward(x, H, W, params, eps=1e-5):
    """Pallas implementation of ConvMerging.forward(x, H, W).

    x: (B, H*W, C) float tokens. Returns (B, (H//2)*(W//2), out_dim).
    """
    B, L, C = x.shape
    assert L == H * W, "input feature has wrong size"
    assert H % 2 == 0 and W % 2 == 0, f"x size ({H}*{W}) are not even."

    conv_w = params["conv_weight"]        # (out_dim, C, 2, 2)
    conv_b = params["conv_bias"]          # (out_dim,)
    gamma = params["bn_weight"]           # (C,)
    beta = params["bn_bias"]              # (C,)
    mean = params["bn_running_mean"]      # (C,)
    var = params["bn_running_var"]        # (C,)
    out_dim = conv_w.shape[0]

    # TODO(synk): training-mode BatchNorm (batch statistics + running-stat
    # update) is not implemented; eval-mode running stats are used and folded
    # exactly into the conv weights/bias.
    s = gamma / jnp.sqrt(var + eps)                         # (C,)
    t = beta - s * mean                                     # (C,)
    w_scaled = conv_w * s[None, :, None, None]              # (O, C, 2, 2)
    # (O, C, di, dj) -> (di, dj, C, O) -> (2, 2*C, O); row index = dj*C + c,
    # matching the native (w-major, channel-minor) token layout of x.
    w3 = jnp.transpose(w_scaled, (2, 3, 1, 0)).reshape(2, 2 * C, out_dim)
    b_eff = conv_b + jnp.einsum("ocij,c->o", conv_w, t)     # (O,)

    Ho, Wo = H // 2, W // 2
    # Free, transpose-less reshape: (B, H*W, C) -> (B*Ho, 2, Wo, 2*C).
    # Axis 1 selects the top/bottom image row of each 2x2 window; the last
    # dim packs the two horizontal positions (dj) times channels.
    x4 = x.reshape(B * Ho, 2, Wo, 2 * C)

    m_rows = B * Ho
    tr = _pick_row_tile(m_rows, Wo, 2 * C, out_dim,
                        jnp.dtype(x.dtype).itemsize)
    grid = (m_rows // tr,)

    y = pl.pallas_call(
        _conv_merge_kernel,
        out_shape=jax.ShapeDtypeStruct((m_rows, Wo, out_dim), x.dtype),
        grid=grid,
        in_specs=[
            pl.BlockSpec((tr, 2, Wo, 2 * C), lambda i: (i, 0, 0, 0)),
            pl.BlockSpec((2, 2 * C, out_dim), lambda i: (0, 0, 0)),  # resident
            pl.BlockSpec((1, out_dim), lambda i: (0, 0)),            # resident
        ],
        out_specs=pl.BlockSpec((tr, Wo, out_dim), lambda i: (i, 0, 0)),
        compiler_params=pltpu.CompilerParams(
            dimension_semantics=("parallel",),
        ),
    )(
        x4,
        w3.astype(x.dtype),
        b_eff.reshape(1, out_dim).astype(jnp.float32),
    )
    return y.reshape(B, Ho * Wo, out_dim)


if __name__ == "__main__":
    key = jax.random.PRNGKey(0)
    k_x, k_w, k_b, k_g, k_be, k_m, k_v = jax.random.split(key, 7)

    B, H, W, dim, out_dim = 2, 16, 16, 32, 64
    x = jax.random.normal(k_x, (B, H * W, dim), dtype=jnp.float32)
    params = {
        "conv_weight": 0.1 * jax.random.normal(k_w, (out_dim, dim, 2, 2), dtype=jnp.float32),
        "conv_bias": 0.1 * jax.random.normal(k_b, (out_dim,), dtype=jnp.float32),
        "bn_weight": 1.0 + 0.1 * jax.random.normal(k_g, (dim,), dtype=jnp.float32),
        "bn_bias": 0.1 * jax.random.normal(k_be, (dim,), dtype=jnp.float32),
        "bn_running_mean": 0.1 * jax.random.normal(k_m, (dim,), dtype=jnp.float32),
        "bn_running_var": 0.5 + jnp.abs(jax.random.normal(k_v, (dim,), dtype=jnp.float32)),
    }

    y = conv_merging_forward(x, H, W, params)
    jax.block_until_ready(y)
    assert y.shape == (B, (H // 2) * (W // 2), out_dim), y.shape
    assert y.dtype == x.dtype

    # Pure-JAX reference of the original PyTorch forward (eval-mode BN).
    eps = 1e-5
    x_img = x.reshape(B, H, W, dim).transpose(0, 3, 1, 2)             # NCHW
    bn = (
        (x_img - params["bn_running_mean"][None, :, None, None])
        / jnp.sqrt(params["bn_running_var"][None, :, None, None] + eps)
        * params["bn_weight"][None, :, None, None]
        + params["bn_bias"][None, :, None, None]
    )
    conv = jax.lax.conv_general_dilated(
        bn,
        params["conv_weight"],
        window_strides=(2, 2),
        padding="VALID",
        dimension_numbers=("NCHW", "OIHW", "NCHW"),
    ) + params["conv_bias"][None, :, None, None]
    y_ref = conv.reshape(B, out_dim, -1).transpose(0, 2, 1)

    err = float(jnp.max(jnp.abs(y - y_ref)))
    assert jnp.allclose(y, y_ref, rtol=1e-2, atol=1e-2), f"max abs err = {err}"
    print("KERNEL_OK")
</pallas_src>

<mosaic_0001>
module attributes {stable_mosaic.version = 11 : i64} {
  func.func @_conv_merge_kernel(%arg0: i32, %arg1: memref<16x2x8x64xf32, #tpu.memory_space<vmem>>, %arg2: memref<2x64x64xf32, #tpu.memory_space<vmem>>, %arg3: memref<1x64xf32, #tpu.memory_space<vmem>>, %arg4: memref<16x8x64xf32, #tpu.memory_space<vmem>>) attributes {dimension_semantics = [#tpu.dimension_semantics<parallel>], iteration_bounds = array<i64: 1>, scalar_prefetch = 0 : i64, scratch_operands = 0 : i64, tpu.core_type = #tpu.core_type<tc>, window_params = [{transform_indices = @transform_0, window_bounds = array<i64: 16, 2, 8, 64>}, {pipeline_mode = #tpu.pipeline_mode<synchronous>, transform_indices = @transform_1, window_bounds = array<i64: 2, 64, 64>}, {pipeline_mode = #tpu.pipeline_mode<synchronous>, transform_indices = @transform_2, window_bounds = array<i64: 1, 64>}, {transform_indices = @transform_3, window_bounds = array<i64: 16, 8, 64>}]} {
    %c0 = arith.constant 0 : index
    %c0_0 = arith.constant 0 : index
    %c0_1 = arith.constant 0 : index
    %c0_2 = arith.constant 0 : index
    %0 = vector.load %arg1[%c0, %c0_0, %c0_1, %c0_2] : memref<16x2x8x64xf32, #tpu.memory_space<vmem>>, vector<16x2x8x64xf32>
    %1 = vector.extract_strided_slice %0 {offsets = [0, 0, 0, 0], sizes = [16, 1, 8, 64], strides = [1, 1, 1, 1]} : vector<16x2x8x64xf32> to vector<16x1x8x64xf32>
    %2 = vector.shape_cast %1 : vector<16x1x8x64xf32> to vector<16x8x64xf32>
    %3 = vector.shape_cast %2 : vector<16x8x64xf32> to vector<128x64xf32>
    %4 = vector.extract_strided_slice %0 {offsets = [0, 1, 0, 0], sizes = [16, 1, 8, 64], strides = [1, 1, 1, 1]} : vector<16x2x8x64xf32> to vector<16x1x8x64xf32>
    %5 = vector.shape_cast %4 : vector<16x1x8x64xf32> to vector<16x8x64xf32>
    %6 = vector.shape_cast %5 : vector<16x8x64xf32> to vector<128x64xf32>
    %c0_3 = arith.constant 0 : index
    %c0_4 = arith.constant 0 : index
    %c0_5 = arith.constant 0 : index
    %7 = vector.load %arg2[%c0_3, %c0_4, %c0_5] : memref<2x64x64xf32, #tpu.memory_space<vmem>>, vector<2x64x64xf32>
    %8 = vector.extract_strided_slice %7 {offsets = [0, 0, 0], sizes = [1, 64, 64], strides = [1, 1, 1]} : vector<2x64x64xf32> to vector<1x64x64xf32>
    %9 = vector.shape_cast %8 : vector<1x64x64xf32> to vector<64x64xf32>
    %cst = arith.constant dense<0.000000e+00> : vector<128x64xf32>
    %10 = tpu.matmul %3, %9, %cst {dimension_numbers = #tpu.dot_dimension_numbers<[1], [0], [0], [1], [0, 0, 1, 1], [], []>} : vector<128x64xf32>, vector<64x64xf32>, vector<128x64xf32> -> vector<128x64xf32>
    %11 = vector.extract_strided_slice %7 {offsets = [1, 0, 0], sizes = [1, 64, 64], strides = [1, 1, 1]} : vector<2x64x64xf32> to vector<1x64x64xf32>
    %12 = vector.shape_cast %11 : vector<1x64x64xf32> to vector<64x64xf32>
    %cst_6 = arith.constant dense<0.000000e+00> : vector<128x64xf32>
    %13 = tpu.matmul %6, %12, %cst_6 {dimension_numbers = #tpu.dot_dimension_numbers<[1], [0], [0], [1], [0, 0, 1, 1], [], []>} : vector<128x64xf32>, vector<64x64xf32>, vector<128x64xf32> -> vector<128x64xf32>
    %14 = arith.addf %10, %13 : vector<128x64xf32>
    %c0_7 = arith.constant 0 : index
    %c0_8 = arith.constant 0 : index
    %15 = vector.load %arg3[%c0_7, %c0_8] : memref<1x64xf32, #tpu.memory_space<vmem>>, vector<1x64xf32>
    %16 = vector.broadcast %15 : vector<1x64xf32> to vector<128x64xf32>
    %17 = arith.addf %14, %16 : vector<128x64xf32>
    %18 = vector.shape_cast %17 : vector<128x64xf32> to vector<16x8x64xf32>
    %c0_9 = arith.constant 0 : index
    %c0_10 = arith.constant 0 : index
    %c0_11 = arith.constant 0 : index
    %19 = vector.load %arg4[%c0_9, %c0_10, %c0_11] : memref<16x8x64xf32, #tpu.memory_space<vmem>>, vector<16x8x64xf32>
    tpu.vector_store %arg4[%c0_9, %c0_10, %c0_11], %18 {strides = array<i32>} : memref<16x8x64xf32, #tpu.memory_space<vmem>>, vector<16x8x64xf32>,
    return
  }
  func.func @transform_0(%arg0: i32) -> (i32, i32, i32, i32) {
    %c0_i32 = arith.constant 0 : i32
    %c0_i32_0 = arith.constant 0 : i32
    %c0_i32_1 = arith.constant 0 : i32
    %c0_i32_2 = arith.constant 0 : i32
    return %arg0, %c0_i32, %c0_i32_0, %c0_i32_1 : i32, i32, i32, i32
  }
  func.func @transform_1(%arg0: i32) -> (i32, i32, i32) {
    %c0_i32 = arith.constant 0 : i32
    %c0_i32_0 = arith.constant 0 : i32
    %c0_i32_1 = arith.constant 0 : i32
    %c0_i32_2 = arith.constant 0 : i32
    return %c0_i32, %c0_i32_0, %c0_i32_1 : i32, i32, i32
  }
  func.func @transform_2(%arg0: i32) -> (i32, i32) {
    %c0_i32 = arith.constant 0 : i32
    %c0_i32_0 = arith.constant 0 : i32
    %c0_i32_1 = arith.constant 0 : i32
    return %c0_i32, %c0_i32_0 : i32, i32
  }
  func.func @transform_3(%arg0: i32) -> (i32, i32, i32) {
    %c0_i32 = arith.constant 0 : i32
    %c0_i32_0 = arith.constant 0 : i32
    %c0_i32_1 = arith.constant 0 : i32
    return %arg0, %c0_i32, %c0_i32_0 : i32, i32, i32
  }
}

</mosaic_0001>

<llo_original>
// kernel: tpu_custom_call.1
$region0: #{tpu_custom_call.1}
  #allocation0 [shape = 'u32[]', space=smem, size = 0x4, offset = 0x4, fixed_abs, tag = 'smem constant byte address 0x4 - core index']
  #allocation1 [shape = 'u32[144,128]{1,0:T(1,128)}', space=vmem, size = 0x12000, scoped, tag = 'internal scratch']
  %s0 = inlined_call_operand.hbm [shape: f32[16,2,8,64], index: 0, kind: input, shape index: {}]
  %s1 = inlined_call_operand.hbm [shape: f32[2,64,64], index: 1, kind: input, shape index: {}]
  %s2 = inlined_call_operand.vmem [shape: f32[1,64], index: 2, kind: input, shape index: {}]
  %s3 = inlined_call_operand.hbm [shape: f32[16,8,64], index: 3, kind: output, shape index: {}]
  %s4 = sld [smem:[#allocation0]]
  $region30: #{tpu_custom_call.1} parent=0
    _
  %s6 = ssub.s32 1, %s4
  %s7 = scalar_select 0, %s6, %s4
  $region1: #{tpu_custom_call.1} parent=0
    #allocation2 [shape = 'u8[131072]{0}', space=vmem, size = 0x20000, scoped, tag = 'input window, operand 0, single buffered']
    #allocation3 [shape = 's32[1]{0}', space=sflag, size = 0x4, scoped, tag = 'scoped memory for tpu_custom_call.1']
    #allocation4 [shape = 's32[1]{0}', space=sflag, size = 0x4, scoped, tag = 'scoped memory for tpu_custom_call.1']
    #allocation5 [shape = 'u8[65536]{0}', space=vmem, size = 0x10000, scoped, tag = 'input window, operand 1, single buffered']
    #allocation6 [shape = 's32[1]{0}', space=sflag, size = 0x4, scoped, tag = 'scoped memory for tpu_custom_call.1']
    #allocation7 [shape = 'u8[65536]{0}', space=vmem, size = 0x10000, scoped, tag = 'output window, operand 0, single buffered']
    %8 = vsyncpa [#allocation3], 0
    %9 = vsyncpa [#allocation6], 0
    %10 = vsyncpa [#allocation4], 0
    // Predicated region
    $region2: #{tpu_custom_call.1} parent=1 // pred_check
      _
    $region3: #{tpu_custom_call.1} parent=1 // pred_check_branch
      %12 = sbr.rel (0) target = $region5
    $region4: #{tpu_custom_call.1} parent=1 // pred_region
      %s14 = ssub.s32 4096, 4096
      %15 = vsyncadd [#allocation3], %s14
      %s16 = sshll.u32 [#allocation2], 4
      %s17 = int_to_ptr.vmem [resolvable:$true] %s16
      %22 = dma.hbm_to_vmem [thread:$0]  %s0, 4096, %s17, [#allocation3], 128, 128, 8
    $region5: #{tpu_custom_call.1} parent=1 // pred_fallthru
      _
    // Predicated region
    $region6: #{tpu_custom_call.1} parent=1 // pred_check
      _
    $region7: #{tpu_custom_call.1} parent=1 // pred_check_branch
      %24 = sbr.rel (0) target = $region9
    $region8: #{tpu_custom_call.1} parent=1 // pred_region
      %s26 = ssub.s32 2048, 2048
      %27 = vsyncadd [#allocation6], %s26
      %s28 = sshll.u32 [#allocation5], 4
      %s29 = int_to_ptr.vmem [resolvable:$true] %s28
      %34 = dma.hbm_to_vmem [thread:$0]  %s1, 2048, %s29, [#allocation6], 128, 128, 8
    $region9: #{tpu_custom_call.1} parent=1 // pred_fallthru
      _
    // Predicated region
    $region10: #{tpu_custom_call.1} parent=1 // pred_check
      _
    $region11: #{tpu_custom_call.1} parent=1 // pred_check_branch
      %36 = sbr.rel (0) target = $region13
    $region12: #{tpu_custom_call.1} parent=1 // pred_region
      _
    $region13: #{tpu_custom_call.1} parent=1 // pred_fallthru
      _
    // Predicated region
    $region14: #{tpu_custom_call.1} parent=1 // pred_check
      _
    $region15: #{tpu_custom_call.1} parent=1 // pred_check_branch
      %38 = sbr.rel (0) target = $region17
    $region16: #{tpu_custom_call.1} parent=1 // pred_region
      %39 = dma.done [#allocation3], 4096
    $region17: #{tpu_custom_call.1} parent=1 // pred_fallthru
      _
    // Predicated region
    $region18: #{tpu_custom_call.1} parent=1 // pred_check
      _
    $region19: #{tpu_custom_call.1} parent=1 // pred_check_branch
      %41 = sbr.rel (0) target = $region21
    $region20: #{tpu_custom_call.1} parent=1 // pred_region
      %42 = dma.done [#allocation6], 2048
    $region21: #{tpu_custom_call.1} parent=1 // pred_fallthru
      _
    %v43 = vld [vmem:[#allocation2] sm:$0xff]
    %v44 = vld [vmem:[#allocation2 + $0x8] sm:$0xff]
    %v45 = vld [vmem:[#allocation2 + $0x10] sm:$0xff]
    %v46 = vld [vmem:[#allocation2 + $0x18] sm:$0xff]
    %v47 = vld [vmem:[#allocation2 + $0x20] sm:$0xff]
    %v48 = vld [vmem:[#allocation2 + $0x28] sm:$0xff]
    %v49 = vld [vmem:[#allocation2 + $0x30] sm:$0xff]
    %v50 = vld [vmem:[#allocation2 + $0x38] sm:$0xff]
    %v51 = vld [vmem:[#allocation2 + $0x40] sm:$0xff]
    %v52 = vld [vmem:[#allocation2 + $0x48] sm:$0xff]
    %v53 = vld [vmem:[#allocation2 + $0x50] sm:$0xff]
    %v54 = vld [vmem:[#allocation2 + $0x58] sm:$0xff]
    %v55 = vld [vmem:[#allocation2 + $0x60] sm:$0xff]
    %v56 = vld [vmem:[#allocation2 + $0x68] sm:$0xff]
    %v57 = vld [vmem:[#allocation2 + $0x70] sm:$0xff]
    %v58 = vld [vmem:[#allocation2 + $0x78] sm:$0xff]
    %v59 = vld [vmem:[#allocation2 + $0x80] sm:$0xff]
    %v60 = vld [vmem:[#allocation2 + $0x88] sm:$0xff]
    %v61 = vld [vmem:[#allocation2 + $0x90] sm:$0xff]
    %v62 = vld [vmem:[#allocation2 + $0x98] sm:$0xff]
    %v63 = vld [vmem:[#allocation2 + $0xa0] sm:$0xff]
    %v64 = vld [vmem:[#allocation2 + $0xa8] sm:$0xff]
    %v65 = vld [vmem:[#allocation2 + $0xb0] sm:$0xff]
    %v66 = vld [vmem:[#allocation2 + $0xb8] sm:$0xff]
    %v67 = vld [vmem:[#allocation2 + $0xc0] sm:$0xff]
    %v68 = vld [vmem:[#allocation2 + $0xc8] sm:$0xff]
    %v69 = vld [vmem:[#allocation2 + $0xd0] sm:$0xff]
    %v70 = vld [vmem:[#allocation2 + $0xd8] sm:$0xff]
    %v71 = vld [vmem:[#allocation2 + $0xe0] sm:$0xff]
    %v72 = vld [vmem:[#allocation2 + $0xe8] sm:$0xff]
    %v73 = vld [vmem:[#allocation2 + $0xf0] sm:$0xff]
    %v74 = vld [vmem:[#allocation2 + $0xf8] sm:$0xff]
    %v75 = vld [vmem:[#allocation5] sm:$0xff]
    %v76 = vld [vmem:[#allocation5 + $0x8] sm:$0xff]
    %v77 = vld [vmem:[#allocation5 + $0x10] sm:$0xff]
    %v78 = vld [vmem:[#allocation5 + $0x18] sm:$0xff]
    %v79 = vld [vmem:[#allocation5 + $0x20] sm:$0xff]
    %v80 = vld [vmem:[#allocation5 + $0x28] sm:$0xff]
    %v81 = vld [vmem:[#allocation5 + $0x30] sm:$0xff]
    %v82 = vld [vmem:[#allocation5 + $0x38] sm:$0xff]
    %v83 = vld [vmem:[#allocation5 + $0x40] sm:$0xff]
    %v84 = vld [vmem:[#allocation5 + $0x48] sm:$0xff]
    %v85 = vld [vmem:[#allocation5 + $0x50] sm:$0xff]
    %v86 = vld [vmem:[#allocation5 + $0x58] sm:$0xff]
    %v87 = vld [vmem:[#allocation5 + $0x60] sm:$0xff]
    %v88 = vld [vmem:[#allocation5 + $0x68] sm:$0xff]
    %v89 = vld [vmem:[#allocation5 + $0x70] sm:$0xff]
    %v90 = vld [vmem:[#allocation5 + $0x78] sm:$0xff]
    %vm91 = vcmask 523264
    %v93 = vsel %vm91, %v44, 0
    %v96 = vsel %vm91, %v46, 0
    %v99 = vsel %vm91, %v48, 0
    %v102 = vsel %vm91, %v50, 0
    %v105 = vsel %vm91, %v52, 0
    %v108 = vsel %vm91, %v54, 0
    %v111 = vsel %vm91, %v56, 0
    %v114 = vsel %vm91, %v58, 0
    %v117 = vsel %vm91, %v60, 0
    %v120 = vsel %vm91, %v62, 0
    %v123 = vsel %vm91, %v64, 0
    %v126 = vsel %vm91, %v66, 0
    %v129 = vsel %vm91, %v68, 0
    %v132 = vsel %vm91, %v70, 0
    %v135 = vsel %vm91, %v72, 0
    %v138 = vsel %vm91, %v74, 0
    %140 = vmatprep.subr.mxu0 0.0
    %141 = vmatpush1.msra.mxu0 %v83
    %142 = vmatprep.subr.mxu0 0.0
    %143 = vmatpush1.msra.mxu0 %v84
    %144 = vmatprep.subr.mxu0 0.0
    %145 = vmatpush1.msra.mxu0 %v85
    %146 = vmatprep.subr.mxu0 0.0
    %147 = vmatpush1.msra.mxu0 %v86
    %148 = vmatprep.subr.mxu0 0.0
    %149 = vmatpush1.msra.mxu0 %v87
    %150 = vmatprep.subr.mxu0 0.0
    %151 = vmatpush1.msra.mxu0 %v88
    %152 = vmatprep.subr.mxu0 0.0
    %153 = vmatpush1.msra.mxu0 %v89
    %154 = vmatprep.subr.mxu0 0.0
    %155 = vmatpush1.msra.mxu0 %v90
    %156 = vmatprep.subr.mxu0 0.0
    %157 = vmatpush1.msra.mxu0 0.0
    %158 = vmatprep.subr.mxu0 0.0
    %159 = vmatpush1.msra.mxu0 0.0
    %160 = vmatprep.subr.mxu0 0.0
    %161 = vmatpush1.msra.mxu0 0.0
    %162 = vmatprep.subr.mxu0 0.0
    %163 = vmatpush1.msra.mxu0 0.0
    %164 = vmatprep.subr.mxu0 0.0
    %165 = vmatpush1.msra.mxu0 0.0
    %166 = vmatprep.subr.mxu0 0.0
    %167 = vmatpush1.msra.mxu0 0.0
    %168 = vmatprep.subr.mxu0 0.0
    %169 = vmatpush1.msra.mxu0 0.0
    %170 = vmatprep.subr.mxu0 0.0
    %171 = vmatpush1.msra.mxu0 0.0
    %172 = vmatprep.subr.mxu0 0.0
    %173 = vmatpush1.msra.mxu0 0.0
    %174 = vmatprep.subr.mxu0 0.0
    %175 = vmatpush1.msra.mxu0 0.0
    %176 = vmatprep.subr.mxu0 0.0
    %177 = vmatpush1.msra.mxu0 0.0
    %178 = vmatprep.subr.mxu0 0.0
    %179 = vmatpush1.msra.mxu0 0.0
    %180 = vmatprep.subr.mxu0 0.0
    %181 = vmatpush1.msra.mxu0 0.0
    %182 = vmatprep.subr.mxu0 0.0
    %183 = vmatpush1.msra.mxu0 0.0
    %184 = vmatprep.subr.mxu0 0.0
    %185 = vmatpush1.msra.mxu0 0.0
    %186 = vmatprep.subr.mxu0 0.0
    %187 = vmatpush1.msra.mxu0 0.0
    %188 = vmatprep.subr.mxu0 0.0
    %189 = vmatpush1.msra.mxu0 0.0
    %190 = vmatprep.subr.mxu0 0.0
    %191 = vmatpush1.msra.mxu0 0.0
    %192 = vmatprep.subr.mxu0 0.0
    %193 = vmatpush1.msra.mxu0 0.0
    %194 = vmatprep.subr.mxu0 0.0
    %195 = vmatpush1.msra.mxu0 0.0
    %196 = vmatprep.subr.mxu0 0.0
    %197 = vmatpush1.msra.mxu0 0.0
    %198 = vmatprep.subr.mxu0 0.0
    %199 = vmatpush1.msra.mxu0 0.0
    %200 = vmatprep.subr.mxu0 0.0
    %201 = vmatpush1.msra.mxu0 0.0
    %202 = vmatprep.subr.mxu0 0.0
    %203 = vmatpush1.msra.mxu0 0.0
    %204 = vmatprep.mubr.f32.mxu0 0.0
    %205 = vmatmul.mubr.f32.gmra.mrb[0].mxu0 %v93
    %v206 = vpop.f32.mrb[0].mxu0
    %v207 = vadd.f32 0.0, %v206
    %v208 = vpop.f32.mrb[0].mxu0
    %209 = vmatprep.mubr.f32.mxu0 0.0
    %210 = vmatmul.mubr.f32.gmra.mrb[0].mxu0 %v96
    %v211 = vpop.f32.mrb[0].mxu0
    %v212 = vadd.f32 0.0, %v211
    %v213 = vpop.f32.mrb[0].mxu0
    %214 = vmatprep.mubr.f32.mxu0 0.0
    %215 = vmatmul.mubr.f32.gmra.mrb[0].mxu0 %v99
    %v216 = vpop.f32.mrb[0].mxu0
    %v217 = vadd.f32 0.0, %v216
    %v218 = vpop.f32.mrb[0].mxu0
    %219 = vmatprep.mubr.f32.mxu0 0.0
    %220 = vmatmul.mubr.f32.gmra.mrb[0].mxu0 %v102
    %v221 = vpop.f32.mrb[0].mxu0
    %v222 = vadd.f32 0.0, %v221
    %v223 = vpop.f32.mrb[0].mxu0
    %224 = vmatprep.mubr.f32.mxu0 0.0
    %225 = vmatmul.mubr.f32.gmra.mrb[0].mxu0 %v105
    %v226 = vpop.f32.mrb[0].mxu0
    %v227 = vadd.f32 0.0, %v226
    %v228 = vpop.f32.mrb[0].mxu0
    %229 = vmatprep.mubr.f32.mxu0 0.0
    %230 = vmatmul.mubr.f32.gmra.mrb[0].mxu0 %v108
    %v231 = vpop.f32.mrb[0].mxu0
    %v232 = vadd.f32 0.0, %v231
    %v233 = vpop.f32.mrb[0].mxu0
    %234 = vmatprep.mubr.f32.mxu0 0.0
    %235 = vmatmul.mubr.f32.gmra.mrb[0].mxu0 %v111
    %v236 = vpop.f32.mrb[0].mxu0
    %v237 = vadd.f32 0.0, %v236
    %v238 = vpop.f32.mrb[0].mxu0
    %239 = vmatprep.mubr.f32.mxu0 0.0
    %240 = vmatmul.mubr.f32.gmra.mrb[0].mxu0 %v114
    %v241 = vpop.f32.mrb[0].mxu0
    %v242 = vadd.f32 0.0, %v241
    %v243 = vpop.f32.mrb[0].mxu0
    %244 = vmatprep.mubr.f32.mxu0 0.0
    %245 = vmatmul.mubr.f32.gmra.mrb[0].mxu0 %v117
    %v246 = vpop.f32.mrb[0].mxu0
    %v247 = vadd.f32 0.0, %v246
    %v248 = vpop.f32.mrb[0].mxu0
    %249 = vmatprep.mubr.f32.mxu0 0.0
    %250 = vmatmul.mubr.f32.gmra.mrb[0].mxu0 %v120
    %v251 = vpop.f32.mrb[0].mxu0
    %v252 = vadd.f32 0.0, %v251
    %v253 = vpop.f32.mrb[0].mxu0
    %254 = vmatprep.mubr.f32.mxu0 0.0
    %255 = vmatmul.mubr.f32.gmra.mrb[0].mxu0 %v123
    %v256 = vpop.f32.mrb[0].mxu0
    %v257 = vadd.f32 0.0, %v256
    %v258 = vpop.f32.mrb[0].mxu0
    %259 = vmatprep.mubr.f32.mxu0 0.0
    %260 = vmatmul.mubr.f32.gmra.mrb[0].mxu0 %v126
    %v261 = vpop.f32.mrb[0].mxu0
    %v262 = vadd.f32 0.0, %v261
    %v263 = vpop.f32.mrb[0].mxu0
    %264 = vmatprep.mubr.f32.mxu0 0.0
    %265 = vmatmul.mubr.f32.gmra.mrb[0].mxu0 %v129
    %v266 = vpop.f32.mrb[0].mxu0
    %v267 = vadd.f32 0.0, %v266
    %v268 = vpop.f32.mrb[0].mxu0
    %269 = vmatprep.mubr.f32.mxu0 0.0
    %270 = vmatmul.mubr.f32.gmra.mrb[0].mxu0 %v132
    %v271 = vpop.f32.mrb[0].mxu0
    %v272 = vadd.f32 0.0, %v271
    %v273 = vpop.f32.mrb[0].mxu0
    %274 = vmatprep.mubr.f32.mxu0 0.0
    %275 = vmatmul.mubr.f32.gmra.mrb[0].mxu0 %v135
    %v276 = vpop.f32.mrb[0].mxu0
    %v277 = vadd.f32 0.0, %v276
    %v278 = vpop.f32.mrb[0].mxu0
    %279 = vmatprep.mubr.f32.mxu0 0.0
    %280 = vmatmul.mubr.f32.gmra.mrb[0].mxu0 %v138
    %v281 = vpop.f32.mrb[0].mxu0
    %v282 = vadd.f32 0.0, %v281
    %v283 = vpop.f32.mrb[0].mxu0
    %284 = vdwg.mxu0
    %v286 = vsel %vm91, %v43, 0
    %v289 = vsel %vm91, %v45, 0
    %v292 = vsel %vm91, %v47, 0
    %v295 = vsel %vm91, %v49, 0
    %v298 = vsel %vm91, %v51, 0
    %v301 = vsel %vm91, %v53, 0
    %v304 = vsel %vm91, %v55, 0
    %v307 = vsel %vm91, %v57, 0
    %v310 = vsel %vm91, %v59, 0
    %v313 = vsel %vm91, %v61, 0
    %v316 = vsel %vm91, %v63, 0
    %v319 = vsel %vm91, %v65, 0
    %v322 = vsel %vm91, %v67, 0
    %v325 = vsel %vm91, %v69, 0
    %v328 = vsel %vm91, %v71, 0
    %v331 = vsel %vm91, %v73, 0
    %333 = vmatprep.subr.mxu0 0.0
    %334 = vmatpush1.msra.mxu0 %v75
    %335 = vmatprep.subr.mxu0 0.0
    %336 = vmatpush1.msra.mxu0 %v76
    %337 = vmatprep.subr.mxu0 0.0
    %338 = vmatpush1.msra.mxu0 %v77
    %339 = vmatprep.subr.mxu0 0.0
    %340 = vmatpush1.msra.mxu0 %v78
    %341 = vmatprep.subr.mxu0 0.0
    %342 = vmatpush1.msra.mxu0 %v79
    %343 = vmatprep.subr.mxu0 0.0
    %344 = vmatpush1.msra.mxu0 %v80
    %345 = vmatprep.subr.mxu0 0.0
    %346 = vmatpush1.msra.mxu0 %v81
    %347 = vmatprep.subr.mxu0 0.0
    %348 = vmatpush1.msra.mxu0 %v82
    %349 = vmatprep.subr.mxu0 0.0
    %350 = vmatpush1.msra.mxu0 0.0
    %351 = vmatprep.subr.mxu0 0.0
    %352 = vmatpush1.msra.mxu0 0.0
    %353 = vmatprep.subr.mxu0 0.0
    %354 = vmatpush1.msra.mxu0 0.0
    %355 = vmatprep.subr.mxu0 0.0
    %356 = vmatpush1.msra.mxu0 0.0
    %357 = vmatprep.subr.mxu0 0.0
    %358 = vmatpush1.msra.mxu0 0.0
    %359 = vmatprep.subr.mxu0 0.0
    %360 = vmatpush1.msra.mxu0 0.0
    %361 = vmatprep.subr.mxu0 0.0
    %362 = vmatpush1.msra.mxu0 0.0
    %363 = vmatprep.subr.mxu0 0.0
    %364 = vmatpush1.msra.mxu0 0.0
    %365 = vmatprep.subr.mxu0 0.0
    %366 = vmatpush1.msra.mxu0 0.0
    %367 = vmatprep.subr.mxu0 0.0
    %368 = vmatpush1.msra.mxu0 0.0
    %369 = vmatprep.subr.mxu0 0.0
    %370 = vmatpush1.msra.mxu0 0.0
    %371 = vmatprep.subr.mxu0 0.0
    %372 = vmatpush1.msra.mxu0 0.0
    %373 = vmatprep.subr.mxu0 0.0
    %374 = vmatpush1.msra.mxu0 0.0
    %375 = vmatprep.subr.mxu0 0.0
    %376 = vmatpush1.msra.mxu0 0.0
    %377 = vmatprep.subr.mxu0 0.0
    %378 = vmatpush1.msra.mxu0 0.0
    %379 = vmatprep.subr.mxu0 0.0
    %380 = vmatpush1.msra.mxu0 0.0
    %381 = vmatprep.subr.mxu0 0.0
    %382 = vmatpush1.msra.mxu0 0.0
    %383 = vmatprep.subr.mxu0 0.0
    %384 = vmatpush1.msra.mxu0 0.0
    %385 = vmatprep.subr.mxu0 0.0
    %386 = vmatpush1.msra.mxu0 0.0
    %387 = vmatprep.subr.mxu0 0.0
    %388 = vmatpush1.msra.mxu0 0.0
    %389 = vmatprep.subr.mxu0 0.0
    %390 = vmatpush1.msra.mxu0 0.0
    %391 = vmatprep.subr.mxu0 0.0
    %392 = vmatpush1.msra.mxu0 0.0
    %393 = vmatprep.subr.mxu0 0.0
    %394 = vmatpush1.msra.mxu0 0.0
    %395 = vmatprep.subr.mxu0 0.0
    %396 = vmatpush1.msra.mxu0 0.0
    %397 = vmatprep.mubr.f32.mxu0 0.0
    %398 = vmatmul.mubr.f32.gmra.mrb[0].mxu0 %v286
    %v399 = vpop.f32.mrb[0].mxu0
    %v400 = vadd.f32 %v207, %v399
    %v401 = vpop.f32.mrb[0].mxu0
    %402 = vmatprep.mubr.f32.mxu0 0.0
    %403 = vmatmul.mubr.f32.gmra.mrb[0].mxu0 %v289
    %v404 = vpop.f32.mrb[0].mxu0
    %v405 = vadd.f32 %v212, %v404
    %v406 = vpop.f32.mrb[0].mxu0
    %407 = vmatprep.mubr.f32.mxu0 0.0
    %408 = vmatmul.mubr.f32.gmra.mrb[0].mxu0 %v292
    %v409 = vpop.f32.mrb[0].mxu0
    %v410 = vadd.f32 %v217, %v409
    %v411 = vpop.f32.mrb[0].mxu0
    %412 = vmatprep.mubr.f32.mxu0 0.0
    %413 = vmatmul.mubr.f32.gmra.mrb[0].mxu0 %v295
    %v414 = vpop.f32.mrb[0].mxu0
    %v415 = vadd.f32 %v222, %v414
    %v416 = vpop.f32.mrb[0].mxu0
    %417 = vmatprep.mubr.f32.mxu0 0.0
    %418 = vmatmul.mubr.f32.gmra.mrb[0].mxu0 %v298
    %v419 = vpop.f32.mrb[0].mxu0
    %v420 = vadd.f32 %v227, %v419
    %v421 = vpop.f32.mrb[0].mxu0
    %422 = vmatprep.mubr.f32.mxu0 0.0
    %423 = vmatmul.mubr.f32.gmra.mrb[0].mxu0 %v301
    %v424 = vpop.f32.mrb[0].mxu0
    %v425 = vadd.f32 %v232, %v424
    %v426 = vpop.f32.mrb[0].mxu0
    %427 = vmatprep.mubr.f32.mxu0 0.0
    %428 = vmatmul.mubr.f32.gmra.mrb[0].mxu0 %v304
    %v429 = vpop.f32.mrb[0].mxu0
    %v430 = vadd.f32 %v237, %v429
    %v431 = vpop.f32.mrb[0].mxu0
    %432 = vmatprep.mubr.f32.mxu0 0.0
    %433 = vmatmul.mubr.f32.gmra.mrb[0].mxu0 %v307
    %v434 = vpop.f32.mrb[0].mxu0
    %v435 = vadd.f32 %v242, %v434
    %v436 = vpop.f32.mrb[0].mxu0
    %437 = vmatprep.mubr.f32.mxu0 0.0
    %438 = vmatmul.mubr.f32.gmra.mrb[0].mxu0 %v310
    %v439 = vpop.f32.mrb[0].mxu0
    %v440 = vadd.f32 %v247, %v439
    %v441 = vpop.f32.mrb[0].mxu0
    %442 = vmatprep.mubr.f32.mxu0 0.0
    %443 = vmatmul.mubr.f32.gmra.mrb[0].mxu0 %v313
    %v444 = vpop.f32.mrb[0].mxu0
    %v445 = vadd.f32 %v252, %v444
    %v446 = vpop.f32.mrb[0].mxu0
    %447 = vmatprep.mubr.f32.mxu0 0.0
    %448 = vmatmul.mubr.f32.gmra.mrb[0].mxu0 %v316
    %v449 = vpop.f32.mrb[0].mxu0
    %v450 = vadd.f32 %v257, %v449
    %v451 = vpop.f32.mrb[0].mxu0
    %452 = vmatprep.mubr.f32.mxu0 0.0
    %453 = vmatmul.mubr.f32.gmra.mrb[0].mxu0 %v319
    %v454 = vpop.f32.mrb[0].mxu0
    %v455 = vadd.f32 %v262, %v454
    %v456 = vpop.f32.mrb[0].mxu0
    %457 = vmatprep.mubr.f32.mxu0 0.0
    %458 = vmatmul.mubr.f32.gmra.mrb[0].mxu0 %v322
    %v459 = vpop.f32.mrb[0].mxu0
    %v460 = vadd.f32 %v267, %v459
    %v461 = vpop.f32.mrb[0].mxu0
    %462 = vmatprep.mubr.f32.mxu0 0.0
    %463 = vmatmul.mubr.f32.gmra.mrb[0].mxu0 %v325
    %v464 = vpop.f32.mrb[0].mxu0
    %v465 = vadd.f32 %v272, %v464
    %v466 = vpop.f32.mrb[0].mxu0
    %467 = vmatprep.mubr.f32.mxu0 0.0
    %468 = vmatmul.mubr.f32.gmra.mrb[0].mxu0 %v328
    %v469 = vpop.f32.mrb[0].mxu0
    %v470 = vadd.f32 %v277, %v469
    %v471 = vpop.f32.mrb[0].mxu0
    %472 = vmatprep.mubr.f32.mxu0 0.0
    %473 = vmatmul.mubr.f32.gmra.mrb[0].mxu0 %v331
    %v474 = vpop.f32.mrb[0].mxu0
    %v475 = vadd.f32 %v282, %v474
    %v476 = vpop.f32.mrb[0].mxu0
    %477 = vdwg.mxu0
    %v478 = vld [vmem:[%s2] sm:$0x1]
    %v480 = vlaneseq
    %v481 = vshrl.u32 %v480, 7
    %v482 = vsub.s32 0, %v481
    %v483 = vrot.slane %v478, %v482
    %v485 = vadd.f32 %v400, %v483
    %v486 = vadd.f32 %v405, %v483
    %v487 = vadd.f32 %v410, %v483
    %v488 = vadd.f32 %v415, %v483
    %v489 = vadd.f32 %v420, %v483
    %v490 = vadd.f32 %v425, %v483
    %v491 = vadd.f32 %v430, %v483
    %v492 = vadd.f32 %v435, %v483
    %v493 = vadd.f32 %v440, %v483
    %v494 = vadd.f32 %v445, %v483
    %v495 = vadd.f32 %v450, %v483
    %v496 = vadd.f32 %v455, %v483
    %v497 = vadd.f32 %v460, %v483
    %v498 = vadd.f32 %v465, %v483
    %v499 = vadd.f32 %v470, %v483
    %v500 = vadd.f32 %v475, %v483
    %501 = vst.msk [vmem:[#allocation7] sm:$0xff] %vm91, %v485
    %502 = vst.msk [vmem:[#allocation7 + $0x8] sm:$0xff] %vm91, %v486
    %503 = vst.msk [vmem:[#allocation7 + $0x10] sm:$0xff] %vm91, %v487
    %504 = vst.msk [vmem:[#allocation7 + $0x18] sm:$0xff] %vm91, %v488
    %505 = vst.msk [vmem:[#allocation7 + $0x20] sm:$0xff] %vm91, %v489
    %506 = vst.msk [vmem:[#allocation7 + $0x28] sm:$0xff] %vm91, %v490
    %507 = vst.msk [vmem:[#allocation7 + $0x30] sm:$0xff] %vm91, %v491
    %508 = vst.msk [vmem:[#allocation7 + $0x38] sm:$0xff] %vm91, %v492
    %509 = vst.msk [vmem:[#allocation7 + $0x40] sm:$0xff] %vm91, %v493
    %510 = vst.msk [vmem:[#allocation7 + $0x48] sm:$0xff] %vm91, %v494
    %511 = vst.msk [vmem:[#allocation7 + $0x50] sm:$0xff] %vm91, %v495
    %512 = vst.msk [vmem:[#allocation7 + $0x58] sm:$0xff] %vm91, %v496
    %513 = vst.msk [vmem:[#allocation7 + $0x60] sm:$0xff] %vm91, %v497
    %514 = vst.msk [vmem:[#allocation7 + $0x68] sm:$0xff] %vm91, %v498
    %515 = vst.msk [vmem:[#allocation7 + $0x70] sm:$0xff] %vm91, %v499
    %516 = vst.msk [vmem:[#allocation7 + $0x78] sm:$0xff] %vm91, %v500
    // Predicated region
    $region22: #{tpu_custom_call.1} parent=1 // pred_check
      _
    $region23: #{tpu_custom_call.1} parent=1 // pred_check_branch
      %518 = sbr.rel (0) target = $region25
    $region24: #{tpu_custom_call.1} parent=1 // pred_region
      %s520 = ssub.s32 2048, 2048
      %521 = vsyncadd [#allocation4], %s520
      %s522 = sshll.u32 [#allocation7], 4
      %s523 = int_to_ptr.vmem [resolvable:$true] %s522
      %528 = dma.vmem_to_hbm [thread:$0]  %s523, 2048, %s3, [#allocation4], 128, 128, 8
    $region25: #{tpu_custom_call.1} parent=1 // pred_fallthru
      _
    // Predicated region
    $region26: #{tpu_custom_call.1} parent=1 // pred_check
      _
    $region27: #{tpu_custom_call.1} parent=1 // pred_check_branch
      %530 = sbr.rel (0) target = $region29
    $region28: #{tpu_custom_call.1} parent=1 // pred_region
      %531 = dma.done [#allocation4], 2048
    $region29: #{tpu_custom_call.1} parent=1 // pred_fallthru
      _
    %532 = vsyncpa [#allocation3], 1
    %533 = vsyncpa [#allocation6], 1
    %534 = vsyncpa [#allocation4], 1

</llo_original>
